<compile_context>
chip_gen: v7x
topology: tpu7x:2x2x1
jax: 0.10.0
libtpu: 0.0.40
codegen_flags: <defaults>
</compile_context>

<pallas_src>
import functools

import jax
import jax.numpy as jnp
from jax.experimental import pallas as pl
from jax.experimental.pallas import tpu as pltpu

_LANES = 128
_TILE_BYTES = 4 * 1024 * 1024     # per-input row-tile cap (double-buffered by Pallas)
_N_CORES = 2                       # v7x megacore split; harmless on v5e/v6e


def _round_up(x, m):
    return ((x + m - 1) // m) * m


def _boundary_loss_kernel(c_ref, g_ref, out_ref, acc_ref, *, inv_count):
    """c_ref: [tile_rows, T_pad] corners, g_ref: [tile_rows, 1] target,
    out_ref: [8, 128] per-core partial, acc_ref: [1, T_pad] VMEM accumulator."""
    j = pl.program_id(1)

    @pl.when(j == 0)
    def _():
        acc_ref[...] = jnp.zeros_like(acc_ref)

    # Lane-broadcast target, fused subtract + square, one sublane reduce.
    diff = c_ref[...] - g_ref[...]
    acc_ref[...] += jnp.sum(diff * diff, axis=0, keepdims=True)

    @pl.when(j == pl.num_programs(1) - 1)
    def _():
        total = jnp.sum(acc_ref[...]) * jnp.float32(inv_count)
        out_ref[...] = jnp.full(out_ref.shape, total, dtype=out_ref.dtype)


def boundary_loss(T_pred, interfaces_target, nx=13, ny=13):
    """Pallas implementation of BoundaryLoss.forward.

    Args:
      T_pred:            [B, T, 1, nx, ny]
      interfaces_target: [B, 4]
    Returns:
      scalar float32 loss
    """
    B, T, _, nx_, ny_ = T_pred.shape
    assert (nx_, ny_) == (nx, ny)
    n_nodes = nx * ny
    interfaces = (0, nx - 1, nx * ny - 1, nx * ny - nx)

    # ---- Wrapper-side layout (static corner gather, no target slab) --------
    t_flat = T_pred.reshape(B, T, n_nodes).astype(jnp.float32)
    # [B, 4, T]: element [b, k, t] = T_pred[b, t, 0].flatten()[interfaces[k]]
    corners = jnp.stack([t_flat[:, :, idx] for idx in interfaces], axis=1)
    rows = B * 4
    corners = corners.reshape(rows, T)
    target = interfaces_target.astype(jnp.float32).reshape(rows, 1)

    count = B * T * 4
    t_pad = pl.cdiv(T, _LANES) * _LANES

    # Pad lanes with the per-row target value so padded lanes contribute 0.
    if t_pad > T:
        lane_fill = jnp.broadcast_to(target, (rows, t_pad - T))
        corners = jnp.concatenate([corners, lane_fill], axis=1)

    # ---- Tile sizing --------------------------------------------------------
    bytes_per_row = t_pad * 4
    max_tile_rows = max(8, (_TILE_BYTES // bytes_per_row) // 8 * 8)
    rows8 = _round_up(rows, 8)
    tile_rows = min(max_tile_rows, max(8, _round_up(rows8 // _N_CORES, 8)))
    tiles_per_core = max(1, pl.cdiv(rows8, tile_rows * _N_CORES))
    rows_pad = _N_CORES * tiles_per_core * tile_rows

    # Zero-pad rows in BOTH operands -> padded rows contribute 0.
    corners = jnp.pad(corners, ((0, rows_pad - rows), (0, 0)))
    target = jnp.pad(target, ((0, rows_pad - rows), (0, 0)))

    kernel = functools.partial(_boundary_loss_kernel, inv_count=1.0 / count)

    out = pl.pallas_call(
        kernel,
        out_shape=jax.ShapeDtypeStruct((_N_CORES * 8, _LANES), jnp.float32),
        grid=(_N_CORES, tiles_per_core),
        in_specs=[
            pl.BlockSpec((tile_rows, t_pad),
                         lambda c, j: (c * tiles_per_core + j, 0)),
            pl.BlockSpec((tile_rows, 1),
                         lambda c, j: (c * tiles_per_core + j, 0)),
        ],
        out_specs=pl.BlockSpec((8, _LANES), lambda c, j: (c, 0)),
        scratch_shapes=[pltpu.VMEM((1, t_pad), jnp.float32)],
        compiler_params=pltpu.CompilerParams(
            dimension_semantics=("parallel", "arbitrary")
        ),
    )(corners, target)

    # Sum the per-core partials (inv_count already applied in-kernel).
    return jnp.sum(out[::8, 0])


def boundary_loss_ref(T_pred, interfaces_target, nx=13, ny=13):
    """Pure-JAX reference mirroring the PyTorch forward."""
    B, T, _, _, _ = T_pred.shape
    n_nodes = nx * ny
    interfaces = jnp.array([0, nx - 1, nx * ny - 1, nx * ny - nx], dtype=jnp.int32)
    t_flat = T_pred.reshape(B, T, 1, n_nodes)
    t_int = t_flat[:, :, 0, :][:, :, interfaces]                # [B, T, 4]
    tgt = interfaces_target[:, None, :]                         # [B, 1, 4]
    return jnp.mean(jnp.abs(t_int - tgt) ** 2)


if __name__ == "__main__":
    key = jax.random.PRNGKey(0)
    k1, k2 = jax.random.split(key)

    B, T, nx, ny = 2, 8, 13, 13
    T_pred = jax.random.normal(k1, (B, T, 1, nx, ny), dtype=jnp.float32)
    interfaces_target = jax.random.normal(k2, (B, 4), dtype=jnp.float32)

    loss_fn = jax.jit(functools.partial(boundary_loss, nx=nx, ny=ny))
    loss = jax.block_until_ready(loss_fn(T_pred, interfaces_target))

    ref = boundary_loss_ref(T_pred, interfaces_target, nx=nx, ny=ny)
    assert jnp.allclose(loss, ref, rtol=1e-5, atol=1e-6), (loss, ref)

    print("KERNEL_OK")
</pallas_src>

<mosaic_0001>
module attributes {stable_mosaic.version = 11 : i64} {
  func.func @_boundary_loss_kernel(%arg0: i32, %arg1: i32, %arg2: memref<8x128xf32, #tpu.memory_space<vmem>>, %arg3: memref<8x1xf32, #tpu.memory_space<vmem>>, %arg4: memref<8x128xf32, #tpu.memory_space<vmem>>, %arg5: memref<1x128xf32, #tpu.memory_space<vmem>>) attributes {dimension_semantics = [#tpu.dimension_semantics<parallel>, #tpu.dimension_semantics<arbitrary>], iteration_bounds = array<i64: 2, 1>, scalar_prefetch = 0 : i64, scratch_operands = 1 : i64, tpu.core_type = #tpu.core_type<tc>, window_params = [{transform_indices = @transform_0, window_bounds = array<i64: 8, 128>}, {transform_indices = @transform_1, window_bounds = array<i64: 8, 1>}, {transform_indices = @transform_2, window_bounds = array<i64: 8, 128>}]} {
    %c0_i32 = arith.constant 0 : i32
    %0 = arith.cmpi eq, %arg1, %c0_i32 : i32
    %1 = arith.extui %0 : i1 to i32
    %c0_i32_0 = arith.constant 0 : i32
    %2 = arith.cmpi ne, %1, %c0_i32_0 : i32
    scf.if %2 {
      %cst_10 = arith.constant 0.000000e+00 : f32
      %16 = vector.broadcast %cst_10 : f32 to vector<1x128xf32>
      %c0_11 = arith.constant 0 : index
      %c0_12 = arith.constant 0 : index
      %17 = vector.load %arg5[%c0_11, %c0_12] : memref<1x128xf32, #tpu.memory_space<vmem>>, vector<1x128xf32>
      tpu.vector_store %arg5[%c0_11, %c0_12], %16 {strides = array<i32>} : memref<1x128xf32, #tpu.memory_space<vmem>>, vector<1x128xf32>,
    } else {
    }
    %c0 = arith.constant 0 : index
    %c0_1 = arith.constant 0 : index
    %3 = vector.load %arg2[%c0, %c0_1] : memref<8x128xf32, #tpu.memory_space<vmem>>, vector<8x128xf32>
    %c0_2 = arith.constant 0 : index
    %c0_3 = arith.constant 0 : index
    %4 = vector.load %arg3[%c0_2, %c0_3] : memref<8x1xf32, #tpu.memory_space<vmem>>, vector<8x1xf32>
    %5 = vector.broadcast %4 : vector<8x1xf32> to vector<8x128xf32>
    %6 = arith.subf %3, %5 : vector<8x128xf32>
    %c0_4 = arith.constant 0 : index
    %c0_5 = arith.constant 0 : index
    %7 = vector.load %arg5[%c0_4, %c0_5] : memref<1x128xf32, #tpu.memory_space<vmem>>, vector<1x128xf32>
    %8 = arith.mulf %6, %6 : vector<8x128xf32>
    %cst = arith.constant dense<0.000000e+00> : vector<128xf32>
    %9 = vector.multi_reduction <add>, %8, %cst [0] : vector<8x128xf32> to vector<128xf32>
    %10 = vector.shape_cast %9 : vector<128xf32> to vector<1x128xf32>
    %11 = arith.addf %7, %10 : vector<1x128xf32>
    %c0_6 = arith.constant 0 : index
    %c0_7 = arith.constant 0 : index
    %12 = vector.load %arg5[%c0_6, %c0_7] : memref<1x128xf32, #tpu.memory_space<vmem>>, vector<1x128xf32>
    tpu.vector_store %arg5[%c0_6, %c0_7], %11 {strides = array<i32>} : memref<1x128xf32, #tpu.memory_space<vmem>>, vector<1x128xf32>,
    %c0_i32_8 = arith.constant 0 : i32
    %13 = arith.cmpi eq, %arg1, %c0_i32_8 : i32
    %14 = arith.extui %13 : i1 to i32
    %c0_i32_9 = arith.constant 0 : i32
    %15 = arith.cmpi ne, %14, %c0_i32_9 : i32
    scf.if %15 {
      %c0_10 = arith.constant 0 : index
      %c0_11 = arith.constant 0 : index
      %16 = vector.load %arg5[%c0_10, %c0_11] : memref<1x128xf32, #tpu.memory_space<vmem>>, vector<1x128xf32>
      %17 = vector.shape_cast %16 : vector<1x128xf32> to vector<1x1x128xf32>
      %cst_12 = arith.constant dense<0.000000e+00> : vector<1xf32>
      %18 = vector.multi_reduction <add>, %17, %cst_12 [1, 2] : vector<1x1x128xf32> to vector<1xf32>
      %19 = vector.shape_cast %18 : vector<1xf32> to vector<1x1x1xf32>
      %20 = vector.extract %19[0, 0, 0] : f32 from vector<1x1x1xf32>
      %cst_13 = arith.constant 1.562500e-02 : f32
      %21 = arith.mulf %20, %cst_13 : f32
      %22 = vector.broadcast %21 : f32 to vector<8x128xf32>
      %c0_14 = arith.constant 0 : index
      %c0_15 = arith.constant 0 : index
      %23 = vector.load %arg4[%c0_14, %c0_15] : memref<8x128xf32, #tpu.memory_space<vmem>>, vector<8x128xf32>
      tpu.vector_store %arg4[%c0_14, %c0_15], %22 {strides = array<i32>} : memref<8x128xf32, #tpu.memory_space<vmem>>, vector<8x128xf32>,
    } else {
    }
    return
  }
  func.func @transform_0(%arg0: i32, %arg1: i32) -> (i32, i32) {
    %c1_i32 = arith.constant 1 : i32
    %0 = arith.muli %arg0, %c1_i32 : i32
    %1 = arith.addi %0, %arg1 : i32
    %c0_i32 = arith.constant 0 : i32
    %c0_i32_0 = arith.constant 0 : i32
    return %1, %c0_i32 : i32, i32
  }
  func.func @transform_1(%arg0: i32, %arg1: i32) -> (i32, i32) {
    %c1_i32 = arith.constant 1 : i32
    %0 = arith.muli %arg0, %c1_i32 : i32
    %1 = arith.addi %0, %arg1 : i32
    %c0_i32 = arith.constant 0 : i32
    %c0_i32_0 = arith.constant 0 : i32
    return %1, %c0_i32 : i32, i32
  }
  func.func @transform_2(%arg0: i32, %arg1: i32) -> (i32, i32) {
    %c0_i32 = arith.constant 0 : i32
    %c0_i32_0 = arith.constant 0 : i32
    return %arg0, %c0_i32 : i32, i32
  }
}

</mosaic_0001>

<llo_original>
// kernel: boundary_loss.1
$region0: #{boundary_loss.1}
  #allocation0 [shape = 'u32[]', space=smem, size = 0x4, offset = 0x4, fixed_abs, tag = 'smem constant byte address 0x4 - core index']
  #allocation1 [shape = 'u32[144,128]{1,0:T(1,128)}', space=vmem, size = 0x12000, scoped, tag = 'internal scratch']
  #allocation2 [shape = 'f32[1,128]{1,0:T(1,128)}', space=vmem, size = 0x200, scoped, tag = 'scratch operand']
  %s0 = inlined_call_operand.vmem [shape: f32[16,128], index: 0, kind: input, shape index: {}]
  %s1 = inlined_call_operand.vmem [shape: f32[16,1], index: 1, kind: input, shape index: {}]
  %s2 = inlined_call_operand.vmem [shape: f32[16,128], index: 2, kind: output, shape index: {}]
  %s3 = sld [smem:[#allocation0]]
  $region49: #{boundary_loss.1} parent=0
    _
  %s5 = ssub.s32 1, %s3
  %s6 = scalar_select 0, %s5, %s3
  loop: start=0, step=1, limit=4
  $region2: #{boundary_loss.1} parent=0 // loop_pre_header
    _
  $region3: #{boundary_loss.1} parent=0 // loop_header
    %s8 = sphi 0, %s12
    %p9 = scmp.ge.s32.totalorder %s8, 4
    %s15 = sphi 0, %s27
    %s16 = sphi 0, %s23
    %s17 = sphi 0, %s15
    %s18 = sphi 0, %s16
    %s19 = sphi 0, %s17
    %s20 = sphi 0, %s18
    %s32 = sphi 0, %s34
    %s35 = sphi 0, %s32
    %s36 = sphi 0, %s35
    %s52 = sphi 0, %s36
    %s60 = sphi 0, %s62
    %s63 = sphi 0, %s60
    %s64 = sphi 0, %s63
    %s80 = sphi 0, %s64
    %s86 = sphi 0, %s88
    %s89 = sphi 0, %s86
    %s90 = sphi 0, %s89
    %s106 = sphi 0, %s90
  $region4: #{boundary_loss.1} parent=0 // loop_header_branch
    %11 = sbr.rel (%p9) target = $region8
  $region5: #{boundary_loss.1} parent=0 // loop_body
    %s13 = ssub.s32 %s8, 1
    %s14 = ssub.s32 %s8, 2
    %s21 = sadd.s32 1, %s16
    %p22 = scmp.ge.s32.totalorder %s21, 1
    %s23 = scalar_select %p22, 0, %s21
    %s24 = sadd.s32 1, %s15
    %s25 = scalar_select %p22, %s24, %s15
    %p26 = scmp.ge.s32.totalorder %s25, 2
    %s27 = scalar_select %p26, 0, %s25
    %s28 = sadd.s32 %s15, %s16
    %s29 = sadd.s32 %s27, %s23
    %s30 = ssub.s32 %s28, %s29
    %p31 = scmp.eq.s32.totalorder %s30, 0
    %s33 = sadd.s32 %s32, 1
    %s34 = scalar_select %p31, %s32, %s33
    %p37 = pneg %p31
    %p38 = scmp.eq.s32.totalorder %s8, 1
    %p39 = por %p37, %p38
    %p40 = scmp.ne.s32.totalorder %s32, %s35
    %p41 = scmp.eq.s32.totalorder %s8, 0
    %p42 = por %p40, %p41
    %p43 = scmp.ne.s32.totalorder %s32, %s35
    %p44 = scmp.eq.s32.totalorder %s13, 1
    %p45 = por %p43, %p44
    %p46 = scmp.ne.s32.totalorder %s35, %s36
    %p47 = scmp.eq.s32.totalorder %s13, 0
    %p48 = por %p46, %p47
    %p49 = scmp.ne.s32.totalorder %s35, %s36
    %p50 = scmp.eq.s32.totalorder %s14, 1
    %p51 = por %p49, %p50
    %p53 = scmp.ne.s32.totalorder %s36, %s52
    %p54 = scmp.eq.s32.totalorder %s14, 0
    %p55 = por %p53, %p54
    %s56 = sadd.s32 %s15, %s16
    %s57 = sadd.s32 %s27, %s23
    %s58 = ssub.s32 %s56, %s57
    %p59 = scmp.eq.s32.totalorder %s58, 0
    %s61 = sadd.s32 %s60, 1
    %s62 = scalar_select %p59, %s60, %s61
    %p65 = pneg %p59
    %p66 = scmp.eq.s32.totalorder %s8, 1
    %p67 = por %p65, %p66
    %p68 = scmp.ne.s32.totalorder %s60, %s63
    %p69 = scmp.eq.s32.totalorder %s8, 0
    %p70 = por %p68, %p69
    %p71 = scmp.ne.s32.totalorder %s60, %s63
    %p72 = scmp.eq.s32.totalorder %s13, 1
    %p73 = por %p71, %p72
    %p74 = scmp.ne.s32.totalorder %s63, %s64
    %p75 = scmp.eq.s32.totalorder %s13, 0
    %p76 = por %p74, %p75
    %p77 = scmp.ne.s32.totalorder %s63, %s64
    %p78 = scmp.eq.s32.totalorder %s14, 1
    %p79 = por %p77, %p78
    %p81 = scmp.ne.s32.totalorder %s64, %s80
    %p82 = scmp.eq.s32.totalorder %s14, 0
    %p83 = por %p81, %p82
    %s84 = ssub.s32 %s15, %s27
    %p85 = scmp.eq.s32.totalorder %s84, 0
    %s87 = sadd.s32 %s86, 1
    %s88 = scalar_select %p85, %s86, %s87
    %p91 = pneg %p85
    %p92 = scmp.eq.s32.totalorder %s8, 1
    %p93 = por %p91, %p92
    %p94 = scmp.ne.s32.totalorder %s86, %s89
    %p95 = scmp.eq.s32.totalorder %s8, 0
    %p96 = por %p94, %p95
    %p97 = scmp.ne.s32.totalorder %s86, %s89
    %p98 = scmp.eq.s32.totalorder %s13, 1
    %p99 = por %p97, %p98
    %p100 = scmp.ne.s32.totalorder %s89, %s90
    %p101 = scmp.eq.s32.totalorder %s13, 0
    %p102 = por %p100, %p101
    %p103 = scmp.ne.s32.totalorder %s89, %s90
    %p104 = scmp.eq.s32.totalorder %s14, 1
    %p105 = por %p103, %p104
    %p107 = scmp.ne.s32.totalorder %s90, %s106
    %p108 = scmp.eq.s32.totalorder %s14, 0
    %p109 = por %p107, %p108
    %p110 = scmp.le.s32.totalorder 1, %s8
    %p111 = scmp.lt.s32.totalorder %s8, 3
    %p112 = pnand %p110, %p111
    %p113 = pneg %p112
    // Predicated region
    $region9: #{boundary_loss.1} parent=5 // pred_check
      _
    $region10: #{boundary_loss.1} parent=5 // pred_check_branch
      %115 = sbr.rel (%p112) target = $region12
    $region11: #{boundary_loss.1} parent=5 // pred_region
      %s116 = ssub.s32 %s8, 1
    $region12: #{boundary_loss.1} parent=5 // pred_fallthru
      _
    %p117 = scmp.lt.s32.totalorder %s8, 2
    // Predicated region
    $region13: #{boundary_loss.1} parent=5 // pred_check
      %p118 = pneg %p117
    $region14: #{boundary_loss.1} parent=5 // pred_check_branch
      %120 = sbr.rel (%p118) target = $region16
    $region15: #{boundary_loss.1} parent=5 // pred_region
      // Predicated region
      $region17: #{boundary_loss.1} parent=15 // pred_check
        %p121 = pneg %p42
      $region18: #{boundary_loss.1} parent=15 // pred_check_branch
        %123 = sbr.rel (%p121) target = $region20
      $region19: #{boundary_loss.1} parent=15 // pred_region
        %s124 = sadd.s32 %s15, %s16
        %p125 = scmp.lt.s32.totalorder %s124, 1
        %s126 = scalar_select %p125, %s124, 1
        %s127 = smul.addr %s126, 8
        %s128 = scalar_lea.vmem %s0, %s127
        %s129 = sadd.s32 %s15, %s16
      $region20: #{boundary_loss.1} parent=15 // pred_fallthru
        _
      // Predicated region
      $region21: #{boundary_loss.1} parent=15 // pred_check
        %p130 = pneg %p70
      $region22: #{boundary_loss.1} parent=15 // pred_check_branch
        %132 = sbr.rel (%p130) target = $region24
      $region23: #{boundary_loss.1} parent=15 // pred_region
        %s133 = sadd.s32 %s15, %s16
        %p134 = scmp.lt.s32.totalorder %s133, 1
        %s135 = scalar_select %p134, %s133, 1
        %s136 = smul.addr %s135, 8
        %s137 = scalar_lea.vmem %s1, %s136
        %s138 = sadd.s32 %s15, %s16
      $region24: #{boundary_loss.1} parent=15 // pred_fallthru
        _
    $region16: #{boundary_loss.1} parent=5 // pred_fallthru
      _
    %p139 = scmp.le.s32.totalorder 1, %s8
    %p140 = scmp.lt.s32.totalorder %s8, 3
    %p141 = pnand %p139, %p140
    %p142 = pneg %p141
    // Predicated region
    $region25: #{boundary_loss.1} parent=5 // pred_check
      _
    $region26: #{boundary_loss.1} parent=5 // pred_check_branch
      %144 = sbr.rel (%p141) target = $region28
    $region27: #{boundary_loss.1} parent=5 // pred_region
      %s145 = ssub.s32 %s8, 1
      %s146 = sadd.s32 %s17, %s18
      %p147 = scmp.lt.s32.totalorder %s146, 1
      %s148 = scalar_select %p147, %s146, 1
      %s149 = smul.addr %s148, 8
      %s150 = scalar_lea.vmem %s0, %s149
      %p151 = pneg %p48
      %p152 = pneg %p45
      %s153 = sadd.s32 %s17, %s18
      %p154 = scmp.lt.s32.totalorder %s153, 1
      %s155 = scalar_select %p154, %s153, 1
      %s156 = smul.addr %s155, 8
      %s157 = scalar_lea.vmem %s1, %s156
      %p158 = pneg %p76
      %p159 = pneg %p73
      %p160 = pneg %p102
      %p161 = pneg %p99
      %p162 = scmp.lt.s32.totalorder %s17, 1
      %s163 = scalar_select %p162, %s17, 1
      %s164 = smul.addr %s163, 8
      %s165 = scalar_lea.vmem %s2, %s164
      %s166 = sadd.s32 %s17, %s18
      %p167 = scmp.lt.s32.totalorder %s166, 1
      %s168 = scalar_select %p167, %s166, 1
      %s169 = smul.addr %s168, 8
      %s170 = scalar_lea.vmem %s0, %s169
      %s171 = sadd.s32 %s17, %s18
      %s172 = sadd.s32 %s17, %s18
      %p173 = scmp.lt.s32.totalorder %s172, 1
      %s174 = scalar_select %p173, %s172, 1
      %s175 = smul.addr %s174, 8
      %s176 = scalar_lea.vmem %s1, %s175
      %s177 = sadd.s32 %s17, %s18
      %p178 = scmp.lt.s32.totalorder %s17, 1
      %s179 = scalar_select %p178, %s17, 1
      %s180 = smul.addr %s179, 8
      %s181 = scalar_lea.vmem %s2, %s180
      %p182 = scmp.eq.s32.totalorder %s18, 0
      // Predicated region
      $region29: #{boundary_loss.1} parent=27 // pred_check
        %p183 = pneg %p182
      $region30: #{boundary_loss.1} parent=27 // pred_check_branch
        %185 = sbr.rel (%p183) target = $region32
      $region31: #{boundary_loss.1} parent=27 // pred_region
        %186 = vst [vmem:[#allocation2] sm:$0x1] 0.0
      $region32: #{boundary_loss.1} parent=27 // pred_fallthru
        _
      %v187 = vld [vmem:[%s170] sm:$0xff]
      %v188 = vld [vmem:[%s176] sm:$0xff]
      %190 = vset.pattern.permute.xlu0 0
      %191 = vperm.xlu0 %190, %v188
      %v192 = vpop.permute.xlu0 %191
      %v194 = vsub.f32 %v187, %v192
      %v195 = vld [vmem:[#allocation2] sm:$0x1]
      %v196 = vmul.f32 %v194, %v194
      %v197 = vrot.slane %v196, 4
      %v198 = vadd.f32 %v196, %v197
      %v199 = vrot.slane %v198, 2
      %v200 = vadd.f32 %v198, %v199
      %v201 = vrot.slane %v200, 1
      %v202 = vadd.f32 %v200, %v201
      %v203 = vadd.f32 %v195, %v202
      %204 = vst [vmem:[#allocation2] sm:$0x1] %v203
      // Predicated region
      $region33: #{boundary_loss.1} parent=27 // pred_check
        %p205 = pneg %p182
      $region34: #{boundary_loss.1} parent=27 // pred_check_branch
        %207 = sbr.rel (%p205) target = $region36
      $region35: #{boundary_loss.1} parent=27 // pred_region
        %v208 = vld [vmem:[#allocation2] sm:$0x1]
        %vm209 = vcmask 1040384
        %v210 = vsel %vm209, %v208, 0.0
        %211 = vadd.xlane.f32.xlu0 %v210
        %v212 = vpop.xlane.xlu0 %211
        %v213 = vrot.slane %v212, 4
        %v214 = vadd.f32 %v212, %v213
        %v215 = vrot.slane %v214, 2
        %v216 = vadd.f32 %v214, %v215
        %v217 = vrot.slane %v216, 1
        %v218 = vadd.f32 %v216, %v217
        %s219 = vtos %v218
        %s220 = smul.f32 %s219, 0.015625
        %v221 = vstv %s220
        %222 = vst [vmem:[%s181] sm:$0xff] %v221
      $region36: #{boundary_loss.1} parent=27 // pred_fallthru
        _
      %p223 = scmp.lt.s32.totalorder %s17, 1
      %s224 = scalar_select %p223, %s17, 1
      %s225 = smul.addr %s224, 8
      %s226 = scalar_lea.vmem %s2, %s225
      // Predicated region
      $region37: #{boundary_loss.1} parent=27 // pred_check
        %p227 = pneg %p99
      $region38: #{boundary_loss.1} parent=27 // pred_check_branch
        %229 = sbr.rel (%p227) target = $region40
      $region39: #{boundary_loss.1} parent=27 // pred_region
        _
      $region40: #{boundary_loss.1} parent=27 // pred_fallthru
        _
    $region28: #{boundary_loss.1} parent=5 // pred_fallthru
      _
    %p230 = scmp.le.s32.totalorder 2, %s8
    // Predicated region
    $region41: #{boundary_loss.1} parent=5 // pred_check
      %p231 = pneg %p230
    $region42: #{boundary_loss.1} parent=5 // pred_check_branch
      %233 = sbr.rel (%p231) target = $region44
    $region43: #{boundary_loss.1} parent=5 // pred_region
      %s234 = ssub.s32 %s8, 2
      // Predicated region
      $region45: #{boundary_loss.1} parent=43 // pred_check
        %p235 = pneg %p105
      $region46: #{boundary_loss.1} parent=43 // pred_check_branch
        %237 = sbr.rel (%p235) target = $region48
      $region47: #{boundary_loss.1} parent=43 // pred_region
        %p238 = scmp.lt.s32.totalorder %s19, 1
        %s239 = scalar_select %p238, %s19, 1
        %s240 = smul.addr %s239, 8
        %s241 = scalar_lea.vmem %s2, %s240
      $region48: #{boundary_loss.1} parent=43 // pred_fallthru
        _
    $region44: #{boundary_loss.1} parent=5 // pred_fallthru
      _
  $region6: #{boundary_loss.1} parent=0 // loop_footer
    %s12 = sadd.s32 1, %s8
  $region7: #{boundary_loss.1} parent=0 // loop_footer_branch
    %7 = sbr.rel target = $region3
  $region8: #{boundary_loss.1} parent=0 // loop_exit
    _

</llo_original>
